<compile_context>
chip_gen: v7x
topology: tpu7x:2x2x1
jax: 0.10.0
libtpu: 0.0.40
codegen_flags: <defaults>
</compile_context>

<pallas_src>
import jax
import jax.numpy as jnp
from jax.experimental import pallas as pl
from jax.experimental.pallas import tpu as pltpu

NUM_USERS = 18100
NUM_PRODUCTS = 2702
EMBEDDING_DIM = 32            # concat feature dim = 64
FEATURES = 2 * EMBEDDING_DIM  # 64
HIDDEN = 128


def recommender_kernel(xt_ref, w1t_ref, b1_ref, w2_ref, b2_ref, o_ref):
    """One batch tile, batch rows on the lane axis.

    xt_ref : (F, bm)  features^T tile           (VMEM, pipelined)
    w1t_ref: (H, F)   fc1 weight, torch (out,in) layout (VMEM, resident)
    b1_ref : (H, 1)   fc1 bias column            (VMEM, resident)
    w2_ref : (H, 1)   fc2 weight column          (VMEM, resident)
    b2_ref : (1, 1)   fc2 bias scalar            (SMEM)
    o_ref  : (1, bm)  sigmoid output, lane-dense
    """
    # fc1 on the MXU: (H, F) @ (F, bm) -> (H, bm), f32 accumulation.
    h = jnp.dot(w1t_ref[...], xt_ref[...], preferred_element_type=jnp.float32)
    h = jnp.maximum(h + b1_ref[...], 0.0)                    # bias + ReLU (VPU)

    # fc2 as VPU multiply + sublane reduction instead of an (H,1) matmul:
    # avoids a 1-column MXU pass and lands the result lane-dense directly.
    y = jnp.sum(h * w2_ref[...], axis=0, keepdims=True)      # (1, bm)
    y = y + b2_ref[0, 0]                                     # scalar bias (SMEM)

    # Sigmoid via tanh -> EUP slot (full f32 accuracy, no VALU divide).
    o_ref[...] = 0.5 * jnp.tanh(0.5 * y) + 0.5


def recommender_forward(ids, user_table, prod_table, w1t, b1, w2, b2,
                        *, block_b=512):
    """ids: (B, 2) int32 -> (B, 1) f32 probabilities."""
    assert block_b % 128 == 0, "block_b must be a multiple of 128 (lane width)"

    # --- glue: embedding gathers + concat (like torch.cat([u, p], dim=1)) ---
    # TODO(synk): fuse this gather into the kernel (VMEM-resident tables + ids
    # prefetched to SMEM) to remove the feats HBM round trip; needs a robust
    # in-kernel dynamic row-gather path.
    user_emb = jnp.take(user_table, ids[:, 0], axis=0)        # (B, D)
    prod_emb = jnp.take(prod_table, ids[:, 1], axis=0)        # (B, D)
    feats = jnp.concatenate([user_emb, prod_emb], axis=1)     # (B, 2D)
    feats = feats.astype(jnp.float32)

    B, F = feats.shape
    H = w1t.shape[0]

    num_tiles = pl.cdiv(B, block_b)
    b_pad = num_tiles * block_b
    if b_pad != B:
        feats = jnp.pad(feats, ((0, b_pad - B), (0, 0)))      # pad rows (sliced off)

    # Put the batch on the lane axis: (F, b_pad).  Output tiles become dense
    # 128-lane rows instead of (block_b, 1) masked stores.
    feats_t = feats.T

    out = pl.pallas_call(
        recommender_kernel,
        out_shape=jax.ShapeDtypeStruct((1, b_pad), jnp.float32),
        grid_spec=pltpu.PrefetchScalarGridSpec(
            num_scalar_prefetch=0,
            grid=(num_tiles,),
            in_specs=[
                pl.BlockSpec((F, block_b), lambda i: (0, i)),   # features^T tile
                pl.BlockSpec((H, F), lambda i: (0, 0)),         # W1 (resident)
                pl.BlockSpec((H, 1), lambda i: (0, 0)),         # b1 (resident)
                pl.BlockSpec((H, 1), lambda i: (0, 0)),         # w2 (resident)
                pl.BlockSpec(memory_space=pltpu.MemorySpace.SMEM),  # b2 scalar
            ],
            out_specs=pl.BlockSpec((1, block_b), lambda i: (0, i)),
        ),
        compiler_params=pltpu.CompilerParams(
            dimension_semantics=("parallel",),   # batch tiles shard across TCs (v7x)
        ),
    )(feats_t, w1t, b1, w2, b2)

    return out[0, :B, None]                                   # (B, 1)


def reference_forward(ids, user_table, prod_table, w1t, b1, w2, b2):
    u = jnp.take(user_table, ids[:, 0], axis=0)
    p = jnp.take(prod_table, ids[:, 1], axis=0)
    x = jnp.concatenate([u, p], axis=1)
    h = jnp.maximum(x @ w1t.T + b1[:, 0], 0.0)
    y = h @ w2 + b2[0, 0]
    return jax.nn.sigmoid(y)


if __name__ == "__main__":
    key = jax.random.PRNGKey(0)
    k_u, k_p, k_w1, k_b1, k_w2, k_b2, k_uid, k_pid = jax.random.split(key, 8)

    D = EMBEDDING_DIM

    # Deterministic parameter init (shapes match nn.Embedding / nn.Linear).
    user_table = jax.random.normal(k_u, (NUM_USERS, D), jnp.float32)
    prod_table = jax.random.normal(k_p, (NUM_PRODUCTS, D), jnp.float32)
    # fc1: Linear(2D -> 128), stored in torch-native (out, in) layout (H, F).
    lim1 = 1.0 / jnp.sqrt(float(FEATURES))
    w1t = jax.random.uniform(k_w1, (HIDDEN, FEATURES), jnp.float32, -lim1, lim1)
    b1 = jax.random.uniform(k_b1, (HIDDEN, 1), jnp.float32, -lim1, lim1)
    # fc2: Linear(128 -> 1); weight as an (H, 1) column, bias as (1, 1).
    lim2 = 1.0 / jnp.sqrt(float(HIDDEN))
    w2 = jax.random.uniform(k_w2, (HIDDEN, 1), jnp.float32, -lim2, lim2)
    b2 = jax.random.uniform(k_b2, (1, 1), jnp.float32, -lim2, lim2)

    # Small demo batch: x[:, 0] = user ids, x[:, 1] = product ids.
    B = 8
    uid = jax.random.randint(k_uid, (B,), 0, NUM_USERS, jnp.int32)
    pid = jax.random.randint(k_pid, (B,), 0, NUM_PRODUCTS, jnp.int32)
    ids = jnp.stack([uid, pid], axis=1)                       # (B, 2) int32

    out = recommender_forward(ids, user_table, prod_table, w1t, b1, w2, b2)
    out = jax.block_until_ready(out)
    ref = reference_forward(ids, user_table, prod_table, w1t, b1, w2, b2)
    assert out.shape == (B, 1)
    assert jnp.allclose(out, ref, atol=1e-4, rtol=1e-4)

    # Second check: multi-tile grid + ragged batch (exercises padding path).
    B2 = 1000
    k_uid2, k_pid2 = jax.random.split(k_uid)
    uid2 = jax.random.randint(k_uid2, (B2,), 0, NUM_USERS, jnp.int32)
    pid2 = jax.random.randint(k_pid2, (B2,), 0, NUM_PRODUCTS, jnp.int32)
    ids2 = jnp.stack([uid2, pid2], axis=1)
    out2 = jax.block_until_ready(
        recommender_forward(ids2, user_table, prod_table, w1t, b1, w2, b2,
                            block_b=512))
    ref2 = reference_forward(ids2, user_table, prod_table, w1t, b1, w2, b2)
    assert out2.shape == (B2, 1)
    assert jnp.allclose(out2, ref2, atol=1e-4, rtol=1e-4)

    print("KERNEL_OK")
</pallas_src>

<mosaic_0001>
module attributes {stable_mosaic.version = 11 : i64} {
  func.func @recommender_kernel(%arg0: i32, %arg1: memref<64x512xf32, #tpu.memory_space<vmem>>, %arg2: memref<128x64xf32, #tpu.memory_space<vmem>>, %arg3: memref<128x1xf32, #tpu.memory_space<vmem>>, %arg4: memref<128x1xf32, #tpu.memory_space<vmem>>, %arg5: memref<1x1xf32, #tpu.memory_space<smem>>, %arg6: memref<1x512xf32, #tpu.memory_space<vmem>>) attributes {dimension_semantics = [#tpu.dimension_semantics<parallel>], iteration_bounds = array<i64: 1>, scalar_prefetch = 0 : i64, scratch_operands = 0 : i64, tpu.core_type = #tpu.core_type<tc>, window_params = [{transform_indices = @transform_0, window_bounds = array<i64: 64, 512>}, {pipeline_mode = #tpu.pipeline_mode<synchronous>, transform_indices = @transform_1, window_bounds = array<i64: 128, 64>}, {pipeline_mode = #tpu.pipeline_mode<synchronous>, transform_indices = @transform_2, window_bounds = array<i64: 128, 1>}, {pipeline_mode = #tpu.pipeline_mode<synchronous>, transform_indices = @transform_3, window_bounds = array<i64: 128, 1>}, {transform_indices = @transform_4, window_bounds = array<i64: 1, 1>}, {transform_indices = @transform_5, window_bounds = array<i64: 1, 512>}]} {
    %c0 = arith.constant 0 : index
    %c0_0 = arith.constant 0 : index
    %0 = vector.load %arg2[%c0, %c0_0] : memref<128x64xf32, #tpu.memory_space<vmem>>, vector<128x64xf32>
    %c0_1 = arith.constant 0 : index
    %c0_2 = arith.constant 0 : index
    %1 = vector.load %arg1[%c0_1, %c0_2] : memref<64x512xf32, #tpu.memory_space<vmem>>, vector<64x512xf32>
    %cst = arith.constant dense<0.000000e+00> : vector<128x512xf32>
    %2 = tpu.matmul %0, %1, %cst {dimension_numbers = #tpu.dot_dimension_numbers<[1], [0], [0], [1], [0, 0, 1, 1], [], []>} : vector<128x64xf32>, vector<64x512xf32>, vector<128x512xf32> -> vector<128x512xf32>
    %c0_3 = arith.constant 0 : index
    %c0_4 = arith.constant 0 : index
    %3 = vector.load %arg3[%c0_3, %c0_4] : memref<128x1xf32, #tpu.memory_space<vmem>>, vector<128x1xf32>
    %4 = vector.broadcast %3 : vector<128x1xf32> to vector<128x512xf32>
    %5 = arith.addf %2, %4 : vector<128x512xf32>
    %cst_5 = arith.constant 0.000000e+00 : f32
    %6 = vector.broadcast %cst_5 : f32 to vector<128x512xf32>
    %7 = arith.maximumf %5, %6 : vector<128x512xf32>
    %c0_6 = arith.constant 0 : index
    %c0_7 = arith.constant 0 : index
    %8 = vector.load %arg4[%c0_6, %c0_7] : memref<128x1xf32, #tpu.memory_space<vmem>>, vector<128x1xf32>
    %9 = vector.broadcast %8 : vector<128x1xf32> to vector<128x512xf32>
    %10 = arith.mulf %7, %9 : vector<128x512xf32>
    %cst_8 = arith.constant dense<0.000000e+00> : vector<512xf32>
    %11 = vector.multi_reduction <add>, %10, %cst_8 [0] : vector<128x512xf32> to vector<512xf32>
    %12 = vector.shape_cast %11 : vector<512xf32> to vector<1x512xf32>
    %c0_9 = arith.constant 0 : index
    %c0_10 = arith.constant 0 : index
    %13 = memref.load %arg5[%c0_9, %c0_10] : memref<1x1xf32, #tpu.memory_space<smem>>
    %14 = vector.broadcast %13 : f32 to vector<1x512xf32>
    %15 = arith.addf %12, %14 : vector<1x512xf32>
    %cst_11 = arith.constant 5.000000e-01 : f32
    %16 = vector.broadcast %cst_11 : f32 to vector<1x512xf32>
    %17 = arith.mulf %16, %15 : vector<1x512xf32>
    %18 = math.tanh %17 : vector<1x512xf32>
    %cst_12 = arith.constant 5.000000e-01 : f32
    %19 = vector.broadcast %cst_12 : f32 to vector<1x512xf32>
    %20 = arith.mulf %19, %18 : vector<1x512xf32>
    %cst_13 = arith.constant 5.000000e-01 : f32
    %21 = vector.broadcast %cst_13 : f32 to vector<1x512xf32>
    %22 = arith.addf %20, %21 : vector<1x512xf32>
    %c0_14 = arith.constant 0 : index
    %c0_15 = arith.constant 0 : index
    %23 = vector.load %arg6[%c0_14, %c0_15] : memref<1x512xf32, #tpu.memory_space<vmem>>, vector<1x512xf32>
    tpu.vector_store %arg6[%c0_14, %c0_15], %22 {strides = array<i32>} : memref<1x512xf32, #tpu.memory_space<vmem>>, vector<1x512xf32>,
    return
  }
  func.func @transform_0(%arg0: i32) -> (i32, i32) {
    %c0_i32 = arith.constant 0 : i32
    %c0_i32_0 = arith.constant 0 : i32
    return %c0_i32, %arg0 : i32, i32
  }
  func.func @transform_1(%arg0: i32) -> (i32, i32) {
    %c0_i32 = arith.constant 0 : i32
    %c0_i32_0 = arith.constant 0 : i32
    %c0_i32_1 = arith.constant 0 : i32
    return %c0_i32, %c0_i32_0 : i32, i32
  }
  func.func @transform_2(%arg0: i32) -> (i32, i32) {
    %c0_i32 = arith.constant 0 : i32
    %c0_i32_0 = arith.constant 0 : i32
    %c0_i32_1 = arith.constant 0 : i32
    return %c0_i32, %c0_i32_0 : i32, i32
  }
  func.func @transform_3(%arg0: i32) -> (i32, i32) {
    %c0_i32 = arith.constant 0 : i32
    %c0_i32_0 = arith.constant 0 : i32
    %c0_i32_1 = arith.constant 0 : i32
    return %c0_i32, %c0_i32_0 : i32, i32
  }
  func.func @transform_4(%arg0: i32) -> (i32, i32) {
    %c0_i32 = arith.constant 0 : i32
    %c0_i32_0 = arith.constant 0 : i32
    %c0_i32_1 = arith.constant 0 : i32
    return %c0_i32, %c0_i32_0 : i32, i32
  }
  func.func @transform_5(%arg0: i32) -> (i32, i32) {
    %c0_i32 = arith.constant 0 : i32
    %c0_i32_0 = arith.constant 0 : i32
    return %c0_i32, %arg0 : i32, i32
  }
}

</mosaic_0001>

<llo_original>
// kernel: tpu_custom_call.1
$region0: #{tpu_custom_call.1}
  #allocation0 [shape = 'u32[]', space=smem, size = 0x4, offset = 0x4, fixed_abs, tag = 'smem constant byte address 0x4 - core index']
  #allocation1 [shape = 'u32[144,128]{1,0:T(1,128)}', space=vmem, size = 0x12000, scoped, tag = 'internal scratch']
  #allocation2 [shape = 'f32[1,1]{1,0:T(1,128)S(6)}', space=smem, size = 0x200, scoped, tag = 'scoped memory for tpu_custom_call.1']
  %s0 = inlined_call_operand.vmem [shape: f32[64,512], index: 0, kind: input, shape index: {}]
  %s1 = inlined_call_operand.vmem [shape: f32[128,64], index: 1, kind: input, shape index: {}]
  %s2 = inlined_call_operand.vmem [shape: f32[128,1], index: 2, kind: input, shape index: {}]
  %s3 = inlined_call_operand.vmem [shape: f32[128,1], index: 3, kind: input, shape index: {}]
  %s4 = inlined_call_operand.<no memory space> [shape: f32[1,1], index: 4, kind: input, shape index: {}]
  %s5 = inlined_call_operand.hbm [shape: f32[1,512], index: 5, kind: output, shape index: {}]
  %s6 = sld [smem:[#allocation0]]
  $region30: #{tpu_custom_call.1} parent=0
    _
  %s8 = ssub.s32 1, %s6
  %s9 = scalar_select 0, %s8, %s6
  %10 = sst [smem:[#allocation2]] %s4
  $region1: #{tpu_custom_call.1} parent=0
    #allocation3 [shape = 'u8[2048]{0}', space=vmem, size = 0x800, scoped, tag = 'output window, operand 0, single buffered']
    #allocation4 [shape = 's32[1]{0}', space=sflag, size = 0x4, scoped, tag = 'scoped memory for tpu_custom_call.1']
    %11 = vsyncpa [#allocation4], 0
    // Predicated region
    $region2: #{tpu_custom_call.1} parent=1 // pred_check
      _
    $region3: #{tpu_custom_call.1} parent=1 // pred_check_branch
      %13 = sbr.rel (0) target = $region5
    $region4: #{tpu_custom_call.1} parent=1 // pred_region
      _
    $region5: #{tpu_custom_call.1} parent=1 // pred_fallthru
      _
    // Predicated region
    $region6: #{tpu_custom_call.1} parent=1 // pred_check
      _
    $region7: #{tpu_custom_call.1} parent=1 // pred_check_branch
      %15 = sbr.rel (0) target = $region9
    $region8: #{tpu_custom_call.1} parent=1 // pred_region
      _
    $region9: #{tpu_custom_call.1} parent=1 // pred_fallthru
      _
    // Predicated region
    $region10: #{tpu_custom_call.1} parent=1 // pred_check
      _
    $region11: #{tpu_custom_call.1} parent=1 // pred_check_branch
      %17 = sbr.rel (0) target = $region13
    $region12: #{tpu_custom_call.1} parent=1 // pred_region
      _
    $region13: #{tpu_custom_call.1} parent=1 // pred_fallthru
      _
    // Predicated region
    $region14: #{tpu_custom_call.1} parent=1 // pred_check
      _
    $region15: #{tpu_custom_call.1} parent=1 // pred_check_branch
      %19 = sbr.rel (0) target = $region17
    $region16: #{tpu_custom_call.1} parent=1 // pred_region
      _
    $region17: #{tpu_custom_call.1} parent=1 // pred_fallthru
      _
    // Predicated region
    $region18: #{tpu_custom_call.1} parent=1 // pred_check
      _
    $region19: #{tpu_custom_call.1} parent=1 // pred_check_branch
      %21 = sbr.rel (0) target = $region21
    $region20: #{tpu_custom_call.1} parent=1 // pred_region
      _
    $region21: #{tpu_custom_call.1} parent=1 // pred_fallthru
      _
    %v22 = vld [vmem:[%s1] sm:$0xff]
    %v23 = vld [vmem:[%s1 + $0x8] sm:$0xff]
    %v24 = vld [vmem:[%s1 + $0x10] sm:$0xff]
    %v25 = vld [vmem:[%s1 + $0x18] sm:$0xff]
    %v26 = vld [vmem:[%s1 + $0x20] sm:$0xff]
    %v27 = vld [vmem:[%s1 + $0x28] sm:$0xff]
    %v28 = vld [vmem:[%s1 + $0x30] sm:$0xff]
    %v29 = vld [vmem:[%s1 + $0x38] sm:$0xff]
    %v30 = vld [vmem:[%s1 + $0x40] sm:$0xff]
    %v31 = vld [vmem:[%s1 + $0x48] sm:$0xff]
    %v32 = vld [vmem:[%s1 + $0x50] sm:$0xff]
    %v33 = vld [vmem:[%s1 + $0x58] sm:$0xff]
    %v34 = vld [vmem:[%s1 + $0x60] sm:$0xff]
    %v35 = vld [vmem:[%s1 + $0x68] sm:$0xff]
    %v36 = vld [vmem:[%s1 + $0x70] sm:$0xff]
    %v37 = vld [vmem:[%s1 + $0x78] sm:$0xff]
    %v38 = vld [vmem:[%s0] sm:$0xff]
    %v39 = vld [vmem:[%s0 + $0x8] sm:$0xff]
    %v40 = vld [vmem:[%s0 + $0x10] sm:$0xff]
    %v41 = vld [vmem:[%s0 + $0x18] sm:$0xff]
    %v42 = vld [vmem:[%s0 + $0x20] sm:$0xff]
    %v43 = vld [vmem:[%s0 + $0x28] sm:$0xff]
    %v44 = vld [vmem:[%s0 + $0x30] sm:$0xff]
    %v45 = vld [vmem:[%s0 + $0x38] sm:$0xff]
    %v46 = vld [vmem:[%s0 + $0x40] sm:$0xff]
    %v47 = vld [vmem:[%s0 + $0x48] sm:$0xff]
    %v48 = vld [vmem:[%s0 + $0x50] sm:$0xff]
    %v49 = vld [vmem:[%s0 + $0x58] sm:$0xff]
    %v50 = vld [vmem:[%s0 + $0x60] sm:$0xff]
    %v51 = vld [vmem:[%s0 + $0x68] sm:$0xff]
    %v52 = vld [vmem:[%s0 + $0x70] sm:$0xff]
    %v53 = vld [vmem:[%s0 + $0x78] sm:$0xff]
    %v54 = vld [vmem:[%s0 + $0x80] sm:$0xff]
    %v55 = vld [vmem:[%s0 + $0x88] sm:$0xff]
    %v56 = vld [vmem:[%s0 + $0x90] sm:$0xff]
    %v57 = vld [vmem:[%s0 + $0x98] sm:$0xff]
    %v58 = vld [vmem:[%s0 + $0xa0] sm:$0xff]
    %v59 = vld [vmem:[%s0 + $0xa8] sm:$0xff]
    %v60 = vld [vmem:[%s0 + $0xb0] sm:$0xff]
    %v61 = vld [vmem:[%s0 + $0xb8] sm:$0xff]
    %v62 = vld [vmem:[%s0 + $0xc0] sm:$0xff]
    %v63 = vld [vmem:[%s0 + $0xc8] sm:$0xff]
    %v64 = vld [vmem:[%s0 + $0xd0] sm:$0xff]
    %v65 = vld [vmem:[%s0 + $0xd8] sm:$0xff]
    %v66 = vld [vmem:[%s0 + $0xe0] sm:$0xff]
    %v67 = vld [vmem:[%s0 + $0xe8] sm:$0xff]
    %v68 = vld [vmem:[%s0 + $0xf0] sm:$0xff]
    %v69 = vld [vmem:[%s0 + $0xf8] sm:$0xff]
    %v70 = vld [vmem:[%s2] sm:$0xff]
    %v71 = vld [vmem:[%s2 + $0x8] sm:$0xff]
    %v72 = vld [vmem:[%s2 + $0x10] sm:$0xff]
    %v73 = vld [vmem:[%s2 + $0x18] sm:$0xff]
    %v74 = vld [vmem:[%s2 + $0x20] sm:$0xff]
    %v75 = vld [vmem:[%s2 + $0x28] sm:$0xff]
    %v76 = vld [vmem:[%s2 + $0x30] sm:$0xff]
    %v77 = vld [vmem:[%s2 + $0x38] sm:$0xff]
    %v78 = vld [vmem:[%s2 + $0x40] sm:$0xff]
    %v79 = vld [vmem:[%s2 + $0x48] sm:$0xff]
    %v80 = vld [vmem:[%s2 + $0x50] sm:$0xff]
    %v81 = vld [vmem:[%s2 + $0x58] sm:$0xff]
    %v82 = vld [vmem:[%s2 + $0x60] sm:$0xff]
    %v83 = vld [vmem:[%s2 + $0x68] sm:$0xff]
    %v84 = vld [vmem:[%s2 + $0x70] sm:$0xff]
    %v85 = vld [vmem:[%s2 + $0x78] sm:$0xff]
    %87 = vset.pattern.permute.xlu0 0
    %88 = vperm.xlu0 %87, %v70
    %v89 = vpop.permute.xlu0 %88
    %92 = vset.pattern.permute.xlu0 0
    %93 = vperm.xlu0 %92, %v71
    %v94 = vpop.permute.xlu0 %93
    %97 = vset.pattern.permute.xlu0 0
    %98 = vperm.xlu0 %97, %v72
    %v99 = vpop.permute.xlu0 %98
    %102 = vset.pattern.permute.xlu0 0
    %103 = vperm.xlu0 %102, %v73
    %v104 = vpop.permute.xlu0 %103
    %107 = vset.pattern.permute.xlu0 0
    %108 = vperm.xlu0 %107, %v74
    %v109 = vpop.permute.xlu0 %108
    %112 = vset.pattern.permute.xlu0 0
    %113 = vperm.xlu0 %112, %v75
    %v114 = vpop.permute.xlu0 %113
    %117 = vset.pattern.permute.xlu0 0
    %118 = vperm.xlu0 %117, %v76
    %v119 = vpop.permute.xlu0 %118
    %122 = vset.pattern.permute.xlu0 0
    %123 = vperm.xlu0 %122, %v77
    %v124 = vpop.permute.xlu0 %123
    %127 = vset.pattern.permute.xlu0 0
    %128 = vperm.xlu0 %127, %v78
    %v129 = vpop.permute.xlu0 %128
    %132 = vset.pattern.permute.xlu0 0
    %133 = vperm.xlu0 %132, %v79
    %v134 = vpop.permute.xlu0 %133
    %137 = vset.pattern.permute.xlu0 0
    %138 = vperm.xlu0 %137, %v80
    %v139 = vpop.permute.xlu0 %138
    %142 = vset.pattern.permute.xlu0 0
    %143 = vperm.xlu0 %142, %v81
    %v144 = vpop.permute.xlu0 %143
    %147 = vset.pattern.permute.xlu0 0
    %148 = vperm.xlu0 %147, %v82
    %v149 = vpop.permute.xlu0 %148
    %152 = vset.pattern.permute.xlu0 0
    %153 = vperm.xlu0 %152, %v83
    %v154 = vpop.permute.xlu0 %153
    %157 = vset.pattern.permute.xlu0 0
    %158 = vperm.xlu0 %157, %v84
    %v159 = vpop.permute.xlu0 %158
    %162 = vset.pattern.permute.xlu0 0
    %163 = vperm.xlu0 %162, %v85
    %v164 = vpop.permute.xlu0 %163
    %vm166 = vcmask 523264
    %v168 = vsel %vm166, %v22, 0
    %v171 = vsel %vm166, %v23, 0
    %v174 = vsel %vm166, %v24, 0
    %v177 = vsel %vm166, %v25, 0
    %v180 = vsel %vm166, %v26, 0
    %v183 = vsel %vm166, %v27, 0
    %v186 = vsel %vm166, %v28, 0
    %v189 = vsel %vm166, %v29, 0
    %v192 = vsel %vm166, %v30, 0
    %v195 = vsel %vm166, %v31, 0
    %v198 = vsel %vm166, %v32, 0
    %v201 = vsel %vm166, %v33, 0
    %v204 = vsel %vm166, %v34, 0
    %v207 = vsel %vm166, %v35, 0
    %v210 = vsel %vm166, %v36, 0
    %v213 = vsel %vm166, %v37, 0
    %215 = vmatprep.subr.mxu0 %v39
    %216 = vmatpush1.msra.mxu0 %v38
    %217 = vmatprep.subr.mxu0 %v43
    %218 = vmatpush1.msra.mxu0 %v42
    %219 = vmatprep.subr.mxu0 %v47
    %220 = vmatpush1.msra.mxu0 %v46
    %221 = vmatprep.subr.mxu0 %v51
    %222 = vmatpush1.msra.mxu0 %v50
    %223 = vmatprep.subr.mxu0 %v55
    %224 = vmatpush1.msra.mxu0 %v54
    %225 = vmatprep.subr.mxu0 %v59
    %226 = vmatpush1.msra.mxu0 %v58
    %227 = vmatprep.subr.mxu0 %v63
    %228 = vmatpush1.msra.mxu0 %v62
    %229 = vmatprep.subr.mxu0 %v67
    %230 = vmatpush1.msra.mxu0 %v66
    %231 = vmatprep.subr.mxu0 0.0
    %232 = vmatpush1.msra.mxu0 0.0
    %233 = vmatprep.subr.mxu0 0.0
    %234 = vmatpush1.msra.mxu0 0.0
    %235 = vmatprep.subr.mxu0 0.0
    %236 = vmatpush1.msra.mxu0 0.0
    %237 = vmatprep.subr.mxu0 0.0
    %238 = vmatpush1.msra.mxu0 0.0
    %239 = vmatprep.subr.mxu0 0.0
    %240 = vmatpush1.msra.mxu0 0.0
    %241 = vmatprep.subr.mxu0 0.0
    %242 = vmatpush1.msra.mxu0 0.0
    %243 = vmatprep.subr.mxu0 0.0
    %244 = vmatpush1.msra.mxu0 0.0
    %245 = vmatprep.subr.mxu0 0.0
    %246 = vmatpush1.msra.mxu0 0.0
    %247 = vmatprep.subr.mxu0 0.0
    %248 = vmatpush1.msra.mxu0 0.0
    %249 = vmatprep.subr.mxu0 0.0
    %250 = vmatpush1.msra.mxu0 0.0
    %251 = vmatprep.subr.mxu0 0.0
    %252 = vmatpush1.msra.mxu0 0.0
    %253 = vmatprep.subr.mxu0 0.0
    %254 = vmatpush1.msra.mxu0 0.0
    %255 = vmatprep.subr.mxu0 0.0
    %256 = vmatpush1.msra.mxu0 0.0
    %257 = vmatprep.subr.mxu0 0.0
    %258 = vmatpush1.msra.mxu0 0.0
    %259 = vmatprep.subr.mxu0 0.0
    %260 = vmatpush1.msra.mxu0 0.0
    %261 = vmatprep.subr.mxu0 0.0
    %262 = vmatpush1.msra.mxu0 0.0
    %263 = vmatprep.subr.mxu0 0.0
    %264 = vmatpush1.msra.mxu0 0.0
    %265 = vmatprep.subr.mxu0 0.0
    %266 = vmatpush1.msra.mxu0 0.0
    %267 = vmatprep.subr.mxu0 0.0
    %268 = vmatpush1.msra.mxu0 0.0
    %269 = vmatprep.subr.mxu0 0.0
    %270 = vmatpush1.msra.mxu0 0.0
    %271 = vmatprep.subr.mxu0 0.0
    %272 = vmatpush1.msra.mxu0 0.0
    %273 = vmatprep.subr.mxu0 0.0
    %274 = vmatpush1.msra.mxu0 0.0
    %275 = vmatprep.subr.mxu0 0.0
    %276 = vmatpush1.msra.mxu0 0.0
    %277 = vmatprep.subr.mxu0 0.0
    %278 = vmatpush1.msra.mxu0 0.0
    %279 = vmatprep.mubr.f32.mxu0 0.0
    %280 = vmatmul.mubr.f32.gmra.mrb[0].mxu0 %v168
    %v281 = vpop.f32.mrb[0].mxu0
    %v282 = vadd.f32 %v89, %v281
    %v283 = vpop.f32.mrb[0].mxu0
    %v284 = vadd.f32 %v89, %v283
    %285 = vmatprep.mubr.f32.mxu0 0.0
    %286 = vmatmul.mubr.f32.gmra.mrb[0].mxu0 %v171
    %v287 = vpop.f32.mrb[0].mxu0
    %v288 = vadd.f32 %v94, %v287
    %v289 = vpop.f32.mrb[0].mxu0
    %v290 = vadd.f32 %v94, %v289
    %291 = vmatprep.mubr.f32.mxu0 0.0
    %292 = vmatmul.mubr.f32.gmra.mrb[0].mxu0 %v174
    %v293 = vpop.f32.mrb[0].mxu0
    %v294 = vadd.f32 %v99, %v293
    %v295 = vpop.f32.mrb[0].mxu0
    %v296 = vadd.f32 %v99, %v295
    %297 = vmatprep.mubr.f32.mxu0 0.0
    %298 = vmatmul.mubr.f32.gmra.mrb[0].mxu0 %v177
    %v299 = vpop.f32.mrb[0].mxu0
    %v300 = vadd.f32 %v104, %v299
    %v301 = vpop.f32.mrb[0].mxu0
    %v302 = vadd.f32 %v104, %v301
    %303 = vmatprep.mubr.f32.mxu0 0.0
    %304 = vmatmul.mubr.f32.gmra.mrb[0].mxu0 %v180
    %v305 = vpop.f32.mrb[0].mxu0
    %v306 = vadd.f32 %v109, %v305
    %v307 = vpop.f32.mrb[0].mxu0
    %v308 = vadd.f32 %v109, %v307
    %309 = vmatprep.mubr.f32.mxu0 0.0
    %310 = vmatmul.mubr.f32.gmra.mrb[0].mxu0 %v183
    %v311 = vpop.f32.mrb[0].mxu0
    %v312 = vadd.f32 %v114, %v311
    %v313 = vpop.f32.mrb[0].mxu0
    %v314 = vadd.f32 %v114, %v313
    %315 = vmatprep.mubr.f32.mxu0 0.0
    %316 = vmatmul.mubr.f32.gmra.mrb[0].mxu0 %v186
    %v317 = vpop.f32.mrb[0].mxu0
    %v318 = vadd.f32 %v119, %v317
    %v319 = vpop.f32.mrb[0].mxu0
    %v320 = vadd.f32 %v119, %v319
    %321 = vmatprep.mubr.f32.mxu0 0.0
    %322 = vmatmul.mubr.f32.gmra.mrb[0].mxu0 %v189
    %v323 = vpop.f32.mrb[0].mxu0
    %v324 = vadd.f32 %v124, %v323
    %v325 = vpop.f32.mrb[0].mxu0
    %v326 = vadd.f32 %v124, %v325
    %327 = vmatprep.mubr.f32.mxu0 0.0
    %328 = vmatmul.mubr.f32.gmra.mrb[0].mxu0 %v192
    %v329 = vpop.f32.mrb[0].mxu0
    %v330 = vadd.f32 %v129, %v329
    %v331 = vpop.f32.mrb[0].mxu0
    %v332 = vadd.f32 %v129, %v331
    %333 = vmatprep.mubr.f32.mxu0 0.0
    %334 = vmatmul.mubr.f32.gmra.mrb[0].mxu0 %v195
    %v335 = vpop.f32.mrb[0].mxu0
    %v336 = vadd.f32 %v134, %v335
    %v337 = vpop.f32.mrb[0].mxu0
    %v338 = vadd.f32 %v134, %v337
    %339 = vmatprep.mubr.f32.mxu0 0.0
    %340 = vmatmul.mubr.f32.gmra.mrb[0].mxu0 %v198
    %v341 = vpop.f32.mrb[0].mxu0
    %v342 = vadd.f32 %v139, %v341
    %v343 = vpop.f32.mrb[0].mxu0
    %v344 = vadd.f32 %v139, %v343
    %345 = vmatprep.mubr.f32.mxu0 0.0
    %346 = vmatmul.mubr.f32.gmra.mrb[0].mxu0 %v201
    %v347 = vpop.f32.mrb[0].mxu0
    %v348 = vadd.f32 %v144, %v347
    %v349 = vpop.f32.mrb[0].mxu0
    %v350 = vadd.f32 %v144, %v349
    %351 = vmatprep.mubr.f32.mxu0 0.0
    %352 = vmatmul.mubr.f32.gmra.mrb[0].mxu0 %v204
    %v353 = vpop.f32.mrb[0].mxu0
    %v354 = vadd.f32 %v149, %v353
    %v355 = vpop.f32.mrb[0].mxu0
    %v356 = vadd.f32 %v149, %v355
    %357 = vmatprep.mubr.f32.mxu0 0.0
    %358 = vmatmul.mubr.f32.gmra.mrb[0].mxu0 %v207
    %v359 = vpop.f32.mrb[0].mxu0
    %v360 = vadd.f32 %v154, %v359
    %v361 = vpop.f32.mrb[0].mxu0
    %v362 = vadd.f32 %v154, %v361
    %363 = vmatprep.mubr.f32.mxu0 0.0
    %364 = vmatmul.mubr.f32.gmra.mrb[0].mxu0 %v210
    %v365 = vpop.f32.mrb[0].mxu0
    %v366 = vadd.f32 %v159, %v365
    %v367 = vpop.f32.mrb[0].mxu0
    %v368 = vadd.f32 %v159, %v367
    %369 = vmatprep.mubr.f32.mxu0 0.0
    %370 = vmatmul.mubr.f32.gmra.mrb[0].mxu0 %v213
    %v371 = vpop.f32.mrb[0].mxu0
    %v372 = vadd.f32 %v164, %v371
    %v373 = vpop.f32.mrb[0].mxu0
    %v374 = vadd.f32 %v164, %v373
    %375 = vdwg.mxu0
    %376 = vmatprep.subr.mxu0 %v41
    %377 = vmatpush1.msra.mxu0 %v40
    %378 = vmatprep.subr.mxu0 %v45
    %379 = vmatpush1.msra.mxu0 %v44
    %380 = vmatprep.subr.mxu0 %v49
    %381 = vmatpush1.msra.mxu0 %v48
    %382 = vmatprep.subr.mxu0 %v53
    %383 = vmatpush1.msra.mxu0 %v52
    %384 = vmatprep.subr.mxu0 %v57
    %385 = vmatpush1.msra.mxu0 %v56
    %386 = vmatprep.subr.mxu0 %v61
    %387 = vmatpush1.msra.mxu0 %v60
    %388 = vmatprep.subr.mxu0 %v65
    %389 = vmatpush1.msra.mxu0 %v64
    %390 = vmatprep.subr.mxu0 %v69
    %391 = vmatpush1.msra.mxu0 %v68
    %392 = vmatprep.subr.mxu0 0.0
    %393 = vmatpush1.msra.mxu0 0.0
    %394 = vmatprep.subr.mxu0 0.0
    %395 = vmatpush1.msra.mxu0 0.0
    %396 = vmatprep.subr.mxu0 0.0
    %397 = vmatpush1.msra.mxu0 0.0
    %398 = vmatprep.subr.mxu0 0.0
    %399 = vmatpush1.msra.mxu0 0.0
    %400 = vmatprep.subr.mxu0 0.0
    %401 = vmatpush1.msra.mxu0 0.0
    %402 = vmatprep.subr.mxu0 0.0
    %403 = vmatpush1.msra.mxu0 0.0
    %404 = vmatprep.subr.mxu0 0.0
    %405 = vmatpush1.msra.mxu0 0.0
    %406 = vmatprep.subr.mxu0 0.0
    %407 = vmatpush1.msra.mxu0 0.0
    %408 = vmatprep.subr.mxu0 0.0
    %409 = vmatpush1.msra.mxu0 0.0
    %410 = vmatprep.subr.mxu0 0.0
    %411 = vmatpush1.msra.mxu0 0.0
    %412 = vmatprep.subr.mxu0 0.0
    %413 = vmatpush1.msra.mxu0 0.0
    %414 = vmatprep.subr.mxu0 0.0
    %415 = vmatpush1.msra.mxu0 0.0
    %416 = vmatprep.subr.mxu0 0.0
    %417 = vmatpush1.msra.mxu0 0.0
    %418 = vmatprep.subr.mxu0 0.0
    %419 = vmatpush1.msra.mxu0 0.0
    %420 = vmatprep.subr.mxu0 0.0
    %421 = vmatpush1.msra.mxu0 0.0
    %422 = vmatprep.subr.mxu0 0.0
    %423 = vmatpush1.msra.mxu0 0.0
    %424 = vmatprep.subr.mxu0 0.0
    %425 = vmatpush1.msra.mxu0 0.0
    %426 = vmatprep.subr.mxu0 0.0
    %427 = vmatpush1.msra.mxu0 0.0
    %428 = vmatprep.subr.mxu0 0.0
    %429 = vmatpush1.msra.mxu0 0.0
    %430 = vmatprep.subr.mxu0 0.0
    %431 = vmatpush1.msra.mxu0 0.0
    %432 = vmatprep.subr.mxu0 0.0
    %433 = vmatpush1.msra.mxu0 0.0
    %434 = vmatprep.subr.mxu0 0.0
    %435 = vmatpush1.msra.mxu0 0.0
    %436 = vmatprep.subr.mxu0 0.0
    %437 = vmatpush1.msra.mxu0 0.0
    %438 = vmatprep.subr.mxu0 0.0
    %439 = vmatpush1.msra.mxu0 0.0
    %440 = vmatprep.mubr.f32.mxu0 0.0
    %441 = vmatmul.mubr.f32.gmra.mrb[0].mxu0 %v168
    %v442 = vpop.f32.mrb[0].mxu0
    %v443 = vadd.f32 %v89, %v442
    %v444 = vpop.f32.mrb[0].mxu0
    %v445 = vadd.f32 %v89, %v444
    %446 = vmatprep.mubr.f32.mxu0 0.0
    %447 = vmatmul.mubr.f32.gmra.mrb[0].mxu0 %v171
    %v448 = vpop.f32.mrb[0].mxu0
    %v449 = vadd.f32 %v94, %v448
    %v450 = vpop.f32.mrb[0].mxu0
    %v451 = vadd.f32 %v94, %v450
    %452 = vmatprep.mubr.f32.mxu0 0.0
    %453 = vmatmul.mubr.f32.gmra.mrb[0].mxu0 %v174
    %v454 = vpop.f32.mrb[0].mxu0
    %v455 = vadd.f32 %v99, %v454
    %v456 = vpop.f32.mrb[0].mxu0
    %v457 = vadd.f32 %v99, %v456
    %458 = vmatprep.mubr.f32.mxu0 0.0
    %459 = vmatmul.mubr.f32.gmra.mrb[0].mxu0 %v177
    %v460 = vpop.f32.mrb[0].mxu0
    %v461 = vadd.f32 %v104, %v460
    %v462 = vpop.f32.mrb[0].mxu0
    %v463 = vadd.f32 %v104, %v462
    %464 = vmatprep.mubr.f32.mxu0 0.0
    %465 = vmatmul.mubr.f32.gmra.mrb[0].mxu0 %v180
    %v466 = vpop.f32.mrb[0].mxu0
    %v467 = vadd.f32 %v109, %v466
    %v468 = vpop.f32.mrb[0].mxu0
    %v469 = vadd.f32 %v109, %v468
    %470 = vmatprep.mubr.f32.mxu0 0.0
    %471 = vmatmul.mubr.f32.gmra.mrb[0].mxu0 %v183
    %v472 = vpop.f32.mrb[0].mxu0
    %v473 = vadd.f32 %v114, %v472
    %v474 = vpop.f32.mrb[0].mxu0
    %v475 = vadd.f32 %v114, %v474
    %476 = vmatprep.mubr.f32.mxu0 0.0
    %477 = vmatmul.mubr.f32.gmra.mrb[0].mxu0 %v186
    %v478 = vpop.f32.mrb[0].mxu0
    %v479 = vadd.f32 %v119, %v478
    %v480 = vpop.f32.mrb[0].mxu0
    %v481 = vadd.f32 %v119, %v480
    %482 = vmatprep.mubr.f32.mxu0 0.0
    %483 = vmatmul.mubr.f32.gmra.mrb[0].mxu0 %v189
    %v484 = vpop.f32.mrb[0].mxu0
    %v485 = vadd.f32 %v124, %v484
    %v486 = vpop.f32.mrb[0].mxu0
    %v487 = vadd.f32 %v124, %v486
    %488 = vmatprep.mubr.f32.mxu0 0.0
    %489 = vmatmul.mubr.f32.gmra.mrb[0].mxu0 %v192
    %v490 = vpop.f32.mrb[0].mxu0
    %v491 = vadd.f32 %v129, %v490
    %v492 = vpop.f32.mrb[0].mxu0
    %v493 = vadd.f32 %v129, %v492
    %494 = vmatprep.mubr.f32.mxu0 0.0
    %495 = vmatmul.mubr.f32.gmra.mrb[0].mxu0 %v195
    %v496 = vpop.f32.mrb[0].mxu0
    %v497 = vadd.f32 %v134, %v496
    %v498 = vpop.f32.mrb[0].mxu0
    %v499 = vadd.f32 %v134, %v498
    %500 = vmatprep.mubr.f32.mxu0 0.0
    %501 = vmatmul.mubr.f32.gmra.mrb[0].mxu0 %v198
    %v502 = vpop.f32.mrb[0].mxu0
    %v503 = vadd.f32 %v139, %v502
    %v504 = vpop.f32.mrb[0].mxu0
    %v505 = vadd.f32 %v139, %v504
    %506 = vmatprep.mubr.f32.mxu0 0.0
    %507 = vmatmul.mubr.f32.gmra.mrb[0].mxu0 %v201
    %v508 = vpop.f32.mrb[0].mxu0
    %v509 = vadd.f32 %v144, %v508
    %v510 = vpop.f32.mrb[0].mxu0
    %v511 = vadd.f32 %v144, %v510
    %512 = vmatprep.mubr.f32.mxu0 0.0
    %513 = vmatmul.mubr.f32.gmra.mrb[0].mxu0 %v204
    %v514 = vpop.f32.mrb[0].mxu0
    %v515 = vadd.f32 %v149, %v514
    %v516 = vpop.f32.mrb[0].mxu0
    %v517 = vadd.f32 %v149, %v516
    %518 = vmatprep.mubr.f32.mxu0 0.0
    %519 = vmatmul.mubr.f32.gmra.mrb[0].mxu0 %v207
    %v520 = vpop.f32.mrb[0].mxu0
    %v521 = vadd.f32 %v154, %v520
    %v522 = vpop.f32.mrb[0].mxu0
    %v523 = vadd.f32 %v154, %v522
    %524 = vmatprep.mubr.f32.mxu0 0.0
    %525 = vmatmul.mubr.f32.gmra.mrb[0].mxu0 %v210
    %v526 = vpop.f32.mrb[0].mxu0
    %v527 = vadd.f32 %v159, %v526
    %v528 = vpop.f32.mrb[0].mxu0
    %v529 = vadd.f32 %v159, %v528
    %530 = vmatprep.mubr.f32.mxu0 0.0
    %531 = vmatmul.mubr.f32.gmra.mrb[0].mxu0 %v213
    %v532 = vpop.f32.mrb[0].mxu0
    %v533 = vadd.f32 %v164, %v532
    %v534 = vpop.f32.mrb[0].mxu0
    %v535 = vadd.f32 %v164, %v534
    %536 = vdwg.mxu0
    %v537 = vmax.f32 %v282, 0.0
    %v538 = vmax.f32 %v284, 0.0
    %v539 = vmax.f32 %v443, 0.0
    %v540 = vmax.f32 %v445, 0.0
    %v541 = vmax.f32 %v288, 0.0
    %v542 = vmax.f32 %v290, 0.0
    %v543 = vmax.f32 %v449, 0.0
    %v544 = vmax.f32 %v451, 0.0
    %v545 = vmax.f32 %v294, 0.0
    %v546 = vmax.f32 %v296, 0.0
    %v547 = vmax.f32 %v455, 0.0
    %v548 = vmax.f32 %v457, 0.0
    %v549 = vmax.f32 %v300, 0.0
    %v550 = vmax.f32 %v302, 0.0
    %v551 = vmax.f32 %v461, 0.0
    %v552 = vmax.f32 %v463, 0.0
    %v553 = vmax.f32 %v306, 0.0
    %v554 = vmax.f32 %v308, 0.0
    %v555 = vmax.f32 %v467, 0.0
    %v556 = vmax.f32 %v469, 0.0
    %v557 = vmax.f32 %v312, 0.0
    %v558 = vmax.f32 %v314, 0.0
    %v559 = vmax.f32 %v473, 0.0
    %v560 = vmax.f32 %v475, 0.0
    %v561 = vmax.f32 %v318, 0.0
    %v562 = vmax.f32 %v320, 0.0
    %v563 = vmax.f32 %v479, 0.0
    %v564 = vmax.f32 %v481, 0.0
    %v565 = vmax.f32 %v324, 0.0
    %v566 = vmax.f32 %v326, 0.0
    %v567 = vmax.f32 %v485, 0.0
    %v568 = vmax.f32 %v487, 0.0
    %v569 = vmax.f32 %v330, 0.0
    %v570 = vmax.f32 %v332, 0.0
    %v571 = vmax.f32 %v491, 0.0
    %v572 = vmax.f32 %v493, 0.0
    %v573 = vmax.f32 %v336, 0.0
    %v574 = vmax.f32 %v338, 0.0
    %v575 = vmax.f32 %v497, 0.0
    %v576 = vmax.f32 %v499, 0.0
    %v577 = vmax.f32 %v342, 0.0
    %v578 = vmax.f32 %v344, 0.0
    %v579 = vmax.f32 %v503, 0.0
    %v580 = vmax.f32 %v505, 0.0
    %v581 = vmax.f32 %v348, 0.0
    %v582 = vmax.f32 %v350, 0.0
    %v583 = vmax.f32 %v509, 0.0
    %v584 = vmax.f32 %v511, 0.0
    %v585 = vmax.f32 %v354, 0.0
    %v586 = vmax.f32 %v356, 0.0
    %v587 = vmax.f32 %v515, 0.0
    %v588 = vmax.f32 %v517, 0.0
    %v589 = vmax.f32 %v360, 0.0
    %v590 = vmax.f32 %v362, 0.0
    %v591 = vmax.f32 %v521, 0.0
    %v592 = vmax.f32 %v523, 0.0
    %v593 = vmax.f32 %v366, 0.0
    %v594 = vmax.f32 %v368, 0.0
    %v595 = vmax.f32 %v527, 0.0
    %v596 = vmax.f32 %v529, 0.0
    %v597 = vmax.f32 %v372, 0.0
    %v598 = vmax.f32 %v374, 0.0
    %v599 = vmax.f32 %v533, 0.0
    %v600 = vmax.f32 %v535, 0.0
    %v601 = vld [vmem:[%s3] sm:$0xff]
    %v602 = vld [vmem:[%s3 + $0x8] sm:$0xff]
    %v603 = vld [vmem:[%s3 + $0x10] sm:$0xff]
    %v604 = vld [vmem:[%s3 + $0x18] sm:$0xff]
    %v605 = vld [vmem:[%s3 + $0x20] sm:$0xff]
    %v606 = vld [vmem:[%s3 + $0x28] sm:$0xff]
    %v607 = vld [vmem:[%s3 + $0x30] sm:$0xff]
    %v608 = vld [vmem:[%s3 + $0x38] sm:$0xff]
    %v609 = vld [vmem:[%s3 + $0x40] sm:$0xff]
    %v610 = vld [vmem:[%s3 + $0x48] sm:$0xff]
    %v611 = vld [vmem:[%s3 + $0x50] sm:$0xff]
    %v612 = vld [vmem:[%s3 + $0x58] sm:$0xff]
    %v613 = vld [vmem:[%s3 + $0x60] sm:$0xff]
    %v614 = vld [vmem:[%s3 + $0x68] sm:$0xff]
    %v615 = vld [vmem:[%s3 + $0x70] sm:$0xff]
    %v616 = vld [vmem:[%s3 + $0x78] sm:$0xff]
    %618 = vset.pattern.permute.xlu0 0
    %619 = vperm.xlu0 %618, %v601
    %v620 = vpop.permute.xlu0 %619
    %623 = vset.pattern.permute.xlu0 0
    %624 = vperm.xlu0 %623, %v602
    %v625 = vpop.permute.xlu0 %624
    %628 = vset.pattern.permute.xlu0 0
    %629 = vperm.xlu0 %628, %v603
    %v630 = vpop.permute.xlu0 %629
    %633 = vset.pattern.permute.xlu0 0
    %634 = vperm.xlu0 %633, %v604
    %v635 = vpop.permute.xlu0 %634
    %638 = vset.pattern.permute.xlu0 0
    %639 = vperm.xlu0 %638, %v605
    %v640 = vpop.permute.xlu0 %639
    %643 = vset.pattern.permute.xlu0 0
    %644 = vperm.xlu0 %643, %v606
    %v645 = vpop.permute.xlu0 %644
    %648 = vset.pattern.permute.xlu0 0
    %649 = vperm.xlu0 %648, %v607
    %v650 = vpop.permute.xlu0 %649
    %653 = vset.pattern.permute.xlu0 0
    %654 = vperm.xlu0 %653, %v608
    %v655 = vpop.permute.xlu0 %654
    %658 = vset.pattern.permute.xlu0 0
    %659 = vperm.xlu0 %658, %v609
    %v660 = vpop.permute.xlu0 %659
    %663 = vset.pattern.permute.xlu0 0
    %664 = vperm.xlu0 %663, %v610
    %v665 = vpop.permute.xlu0 %664
    %668 = vset.pattern.permute.xlu0 0
    %669 = vperm.xlu0 %668, %v611
    %v670 = vpop.permute.xlu0 %669
    %673 = vset.pattern.permute.xlu0 0
    %674 = vperm.xlu0 %673, %v612
    %v675 = vpop.permute.xlu0 %674
    %678 = vset.pattern.permute.xlu0 0
    %679 = vperm.xlu0 %678, %v613
    %v680 = vpop.permute.xlu0 %679
    %683 = vset.pattern.permute.xlu0 0
    %684 = vperm.xlu0 %683, %v614
    %v685 = vpop.permute.xlu0 %684
    %688 = vset.pattern.permute.xlu0 0
    %689 = vperm.xlu0 %688, %v615
    %v690 = vpop.permute.xlu0 %689
    %693 = vset.pattern.permute.xlu0 0
    %694 = vperm.xlu0 %693, %v616
    %v695 = vpop.permute.xlu0 %694
    %v697 = vmul.f32 %v537, %v620
    %v698 = vmul.f32 %v538, %v620
    %v699 = vmul.f32 %v539, %v620
    %v700 = vmul.f32 %v540, %v620
    %v701 = vmul.f32 %v541, %v625
    %v702 = vmul.f32 %v542, %v625
    %v703 = vmul.f32 %v543, %v625
    %v704 = vmul.f32 %v544, %v625
    %v705 = vmul.f32 %v545, %v630
    %v706 = vmul.f32 %v546, %v630
    %v707 = vmul.f32 %v547, %v630
    %v708 = vmul.f32 %v548, %v630
    %v709 = vmul.f32 %v549, %v635
    %v710 = vmul.f32 %v550, %v635
    %v711 = vmul.f32 %v551, %v635
    %v712 = vmul.f32 %v552, %v635
    %v713 = vmul.f32 %v553, %v640
    %v714 = vmul.f32 %v554, %v640
    %v715 = vmul.f32 %v555, %v640
    %v716 = vmul.f32 %v556, %v640
    %v717 = vmul.f32 %v557, %v645
    %v718 = vmul.f32 %v558, %v645
    %v719 = vmul.f32 %v559, %v645
    %v720 = vmul.f32 %v560, %v645
    %v721 = vmul.f32 %v561, %v650
    %v722 = vmul.f32 %v562, %v650
    %v723 = vmul.f32 %v563, %v650
    %v724 = vmul.f32 %v564, %v650
    %v725 = vmul.f32 %v565, %v655
    %v726 = vmul.f32 %v566, %v655
    %v727 = vmul.f32 %v567, %v655
    %v728 = vmul.f32 %v568, %v655
    %v729 = vmul.f32 %v569, %v660
    %v730 = vmul.f32 %v570, %v660
    %v731 = vmul.f32 %v571, %v660
    %v732 = vmul.f32 %v572, %v660
    %v733 = vmul.f32 %v573, %v665
    %v734 = vmul.f32 %v574, %v665
    %v735 = vmul.f32 %v575, %v665
    %v736 = vmul.f32 %v576, %v665
    %v737 = vmul.f32 %v577, %v670
    %v738 = vmul.f32 %v578, %v670
    %v739 = vmul.f32 %v579, %v670
    %v740 = vmul.f32 %v580, %v670
    %v741 = vmul.f32 %v581, %v675
    %v742 = vmul.f32 %v582, %v675
    %v743 = vmul.f32 %v583, %v675
    %v744 = vmul.f32 %v584, %v675
    %v745 = vmul.f32 %v585, %v680
    %v746 = vmul.f32 %v586, %v680
    %v747 = vmul.f32 %v587, %v680
    %v748 = vmul.f32 %v588, %v680
    %v749 = vmul.f32 %v589, %v685
    %v750 = vmul.f32 %v590, %v685
    %v751 = vmul.f32 %v591, %v685
    %v752 = vmul.f32 %v592, %v685
    %v753 = vmul.f32 %v593, %v690
    %v754 = vmul.f32 %v594, %v690
    %v755 = vmul.f32 %v595, %v690
    %v756 = vmul.f32 %v596, %v690
    %v757 = vmul.f32 %v597, %v695
    %v758 = vmul.f32 %v598, %v695
    %v759 = vmul.f32 %v599, %v695
    %v760 = vmul.f32 %v600, %v695
    %v761 = vadd.f32 %v697, %v701
    %v762 = vadd.f32 %v761, %v705
    %v763 = vadd.f32 %v762, %v709
    %v764 = vadd.f32 %v763, %v713
    %v765 = vadd.f32 %v764, %v717
    %v766 = vadd.f32 %v765, %v721
    %v767 = vadd.f32 %v766, %v725
    %v768 = vadd.f32 %v767, %v729
    %v769 = vadd.f32 %v768, %v733
    %v770 = vadd.f32 %v769, %v737
    %v771 = vadd.f32 %v770, %v741
    %v772 = vadd.f32 %v771, %v745
    %v773 = vadd.f32 %v772, %v749
    %v774 = vadd.f32 %v773, %v753
    %v775 = vadd.f32 %v774, %v757
    %v776 = vrot.slane %v775, 4
    %v777 = vadd.f32 %v775, %v776
    %v778 = vrot.slane %v777, 2
    %v779 = vadd.f32 %v777, %v778
    %v780 = vrot.slane %v779, 1
    %v781 = vadd.f32 %v779, %v780
    %v782 = vadd.f32 %v698, %v702
    %v783 = vadd.f32 %v782, %v706
    %v784 = vadd.f32 %v783, %v710
    %v785 = vadd.f32 %v784, %v714
    %v786 = vadd.f32 %v785, %v718
    %v787 = vadd.f32 %v786, %v722
    %v788 = vadd.f32 %v787, %v726
    %v789 = vadd.f32 %v788, %v730
    %v790 = vadd.f32 %v789, %v734
    %v791 = vadd.f32 %v790, %v738
    %v792 = vadd.f32 %v791, %v742
    %v793 = vadd.f32 %v792, %v746
    %v794 = vadd.f32 %v793, %v750
    %v795 = vadd.f32 %v794, %v754
    %v796 = vadd.f32 %v795, %v758
    %v797 = vrot.slane %v796, 4
    %v798 = vadd.f32 %v796, %v797
    %v799 = vrot.slane %v798, 2
    %v800 = vadd.f32 %v798, %v799
    %v801 = vrot.slane %v800, 1
    %v802 = vadd.f32 %v800, %v801
    %v803 = vadd.f32 %v699, %v703
    %v804 = vadd.f32 %v803, %v707
    %v805 = vadd.f32 %v804, %v711
    %v806 = vadd.f32 %v805, %v715
    %v807 = vadd.f32 %v806, %v719
    %v808 = vadd.f32 %v807, %v723
    %v809 = vadd.f32 %v808, %v727
    %v810 = vadd.f32 %v809, %v731
    %v811 = vadd.f32 %v810, %v735
    %v812 = vadd.f32 %v811, %v739
    %v813 = vadd.f32 %v812, %v743
    %v814 = vadd.f32 %v813, %v747
    %v815 = vadd.f32 %v814, %v751
    %v816 = vadd.f32 %v815, %v755
    %v817 = vadd.f32 %v816, %v759
    %v818 = vrot.slane %v817, 4
    %v819 = vadd.f32 %v817, %v818
    %v820 = vrot.slane %v819, 2
    %v821 = vadd.f32 %v819, %v820
    %v822 = vrot.slane %v821, 1
    %v823 = vadd.f32 %v821, %v822
    %v824 = vadd.f32 %v700, %v704
    %v825 = vadd.f32 %v824, %v708
    %v826 = vadd.f32 %v825, %v712
    %v827 = vadd.f32 %v826, %v716
    %v828 = vadd.f32 %v827, %v720
    %v829 = vadd.f32 %v828, %v724
    %v830 = vadd.f32 %v829, %v728
    %v831 = vadd.f32 %v830, %v732
    %v832 = vadd.f32 %v831, %v736
    %v833 = vadd.f32 %v832, %v740
    %v834 = vadd.f32 %v833, %v744
    %v835 = vadd.f32 %v834, %v748
    %v836 = vadd.f32 %v835, %v752
    %v837 = vadd.f32 %v836, %v756
    %v838 = vadd.f32 %v837, %v760
    %v839 = vrot.slane %v838, 4
    %v840 = vadd.f32 %v838, %v839
    %v841 = vrot.slane %v840, 2
    %v842 = vadd.f32 %v840, %v841
    %v843 = vrot.slane %v842, 1
    %v844 = vadd.f32 %v842, %v843
    %s845 = sld [smem:[#allocation2]]
    %v846 = vstv %s845
    %v847 = vadd.f32 %v781, %v846
    %v848 = vadd.f32 %v802, %v846
    %v849 = vadd.f32 %v823, %v846
    %v850 = vadd.f32 %v844, %v846
    %v851 = vmul.f32 %v847, 0.5
    %v852 = vmul.f32 %v848, 0.5
    %v853 = vmul.f32 %v849, 0.5
    %v854 = vmul.f32 %v850, 0.5
    %v855 = vtanh.pop %v851
    %v856 = vtanh.pop %v852
    %v857 = vtanh.pop %v853
    %v858 = vtanh.pop %v854
    %v859 = vmul.f32 %v855, 0.5
    %v860 = vmul.f32 %v856, 0.5
    %v861 = vmul.f32 %v857, 0.5
    %v862 = vmul.f32 %v858, 0.5
    %v863 = vadd.f32 %v859, 0.5
    %v864 = vadd.f32 %v860, 0.5
    %v865 = vadd.f32 %v861, 0.5
    %v866 = vadd.f32 %v862, 0.5
    %v871 = vcombine.low %v863, %v864
    %v872 = vcombine.low %v865, %v866
    %v874 = vunpack.c.l.s4 1966171168
    %v875 = vunpack.c.0.s8 %v874
    %v876 = vlaneseq
    %v877 = vshrl.u32 %v876, 7
    %v878 = vsub.s32 %v875, %v877
    %v879 = vrot.slane %v871, %v878
    %v881 = vunpack.c.l.s4 1966171168
    %v882 = vunpack.c.0.s8 %v881
    %v883 = vlaneseq
    %v884 = vshrl.u32 %v883, 7
    %v885 = vsub.s32 %v882, %v884
    %v886 = vrot.slane %v872, %v885
    %v887 = vcombine.low %v879, %v886
    %v889 = vunpack.c.l.s4 1966171168
    %v890 = vunpack.c.0.s8 %v889
    %v891 = vlaneseq
    %v892 = vshrl.u32 %v891, 7
    %v893 = vsub.s32 %v890, %v892
    %v894 = vrot.slane %v887, %v893
    %v896 = vlaneseq
    %vm897 = vcmp.ge.s32.totalorder %v896, 0
    %vm898 = vcmp.lt.s32.totalorder %v896, 512
    %vm899 = vmand %vm897, %vm898
    %900 = vst.msk [vmem:[#allocation3] sm:$0xf] %vm899, %v894
    // Predicated region
    $region22: #{tpu_custom_call.1} parent=1 // pred_check
      _
    $region23: #{tpu_custom_call.1} parent=1 // pred_check_branch
      %902 = sbr.rel (0) target = $region25
    $region24: #{tpu_custom_call.1} parent=1 // pred_region
      %s904 = ssub.s32 64, 64
      %905 = vsyncadd [#allocation4], %s904
      %s907 = sshll.u32 [#allocation3], 4
      %s908 = int_to_ptr.vmem [resolvable:$true] %s907
      %910 = dma.vmem_to_hbm [thread:$0]  %s908, 64, %s5, [#allocation4]
    $region25: #{tpu_custom_call.1} parent=1 // pred_fallthru
      _
    // Predicated region
    $region26: #{tpu_custom_call.1} parent=1 // pred_check
      _
    $region27: #{tpu_custom_call.1} parent=1 // pred_check_branch
      %912 = sbr.rel (0) target = $region29
    $region28: #{tpu_custom_call.1} parent=1 // pred_region
      %913 = dma.done [#allocation4], 64
    $region29: #{tpu_custom_call.1} parent=1 // pred_fallthru
      _
    %914 = vsyncpa [#allocation4], 1

</llo_original>
